<compile_context>
chip_gen: v5e
topology: v5e:2x2
jax: 0.10.0
libtpu: 0.0.40
codegen_flags: <defaults>
</compile_context>

<pallas_src>
import functools

import jax
import jax.numpy as jnp
from jax.experimental import pallas as pl
from jax.experimental.pallas import tpu as pltpu


def _round_up(x: int, m: int) -> int:
    return (x + m - 1) // m * m


def _linear_kernel_single_k(x_ref, w_ref, b_ref, o_ref):
    # Whole reduction in one MXU call; fuse bias + downcast.
    acc = jnp.dot(x_ref[...], w_ref[...], preferred_element_type=jnp.float32)
    o_ref[...] = (acc + b_ref[...].astype(jnp.float32)).astype(o_ref.dtype)


def _linear_kernel_multi_k(x_ref, w_ref, b_ref, o_ref, acc_ref):
    k = pl.program_id(2)

    @pl.when(k == 0)
    def _init():
        acc_ref[...] = jnp.zeros_like(acc_ref)

    acc_ref[...] += jnp.dot(x_ref[...], w_ref[...],
                            preferred_element_type=jnp.float32)

    @pl.when(k == pl.num_programs(2) - 1)
    def _finalize():
        # Bias add + downcast once per (i, j) tile, outside the K loop.
        o_ref[...] = (acc_ref[...] + b_ref[...].astype(jnp.float32)
                      ).astype(o_ref.dtype)


@functools.partial(jax.jit,
                   static_argnames=("tm", "tn", "tk", "compute_dtype"))
def mlp_forward(x, w, b, *, tm=128, tn=256, tk=256, compute_dtype=None):
    """y = x @ w + b   (w is [D_in, D_out], b is [D_out]) — nn.Linear forward."""
    out_dtype = x.dtype
    orig_lead = x.shape[:-1]
    D_in = x.shape[-1]
    D_out = w.shape[1]
    x2d = x.reshape(-1, D_in)
    M = x2d.shape[0]

    # Optional low-precision operand path (accumulation stays f32).
    if compute_dtype is not None:
        x2d = x2d.astype(compute_dtype)
        w = w.astype(compute_dtype)

    # Adapt tile sizes to the (possibly tiny) problem while keeping
    # (8, 128) alignment and lane-dense feature tiles.
    tm = min(tm, _round_up(M, 8))
    tk = min(tk, _round_up(D_in, 128))
    tn = min(tn, _round_up(D_out, 128))

    Mp = _round_up(M, tm)
    Kp = _round_up(D_in, tk)
    Np = _round_up(D_out, tn)

    # Zero-padding is exact for a matmul; padded bias columns are sliced away.
    # Only pad when the shape actually requires it.
    x_p = x2d if (Mp == M and Kp == D_in) else jnp.pad(
        x2d, ((0, Mp - M), (0, Kp - D_in)))
    w_p = w if (Kp == D_in and Np == D_out) else jnp.pad(
        w, ((0, Kp - D_in), (0, Np - D_out)))
    b_p = (b if Np == D_out else jnp.pad(b, (0, Np - D_out))).reshape(1, Np)

    k_steps = Kp // tk

    if k_steps == 1:
        # Fast path: no reduction loop, no scratch accumulator.
        grid = (Mp // tm, Np // tn)
        out_p = pl.pallas_call(
            _linear_kernel_single_k,
            out_shape=jax.ShapeDtypeStruct((Mp, Np), out_dtype),
            grid_spec=pltpu.PrefetchScalarGridSpec(
                num_scalar_prefetch=0,
                grid=grid,
                in_specs=[
                    pl.BlockSpec((tm, Kp), lambda i, j: (i, 0)),   # x tile
                    pl.BlockSpec((Kp, tn), lambda i, j: (0, j)),   # W tile
                    pl.BlockSpec((1, tn), lambda i, j: (0, j)),    # bias stripe
                ],
                out_specs=pl.BlockSpec((tm, tn), lambda i, j: (i, j)),
            ),
            compiler_params=pltpu.CompilerParams(
                dimension_semantics=("parallel", "parallel"),
            ),
        )(x_p, w_p, b_p)
    else:
        grid = (Mp // tm, Np // tn, k_steps)
        out_p = pl.pallas_call(
            _linear_kernel_multi_k,
            out_shape=jax.ShapeDtypeStruct((Mp, Np), out_dtype),
            grid_spec=pltpu.PrefetchScalarGridSpec(
                num_scalar_prefetch=0,
                grid=grid,
                in_specs=[
                    pl.BlockSpec((tm, tk), lambda i, j, k: (i, k)),   # x tile
                    pl.BlockSpec((tk, tn), lambda i, j, k: (k, j)),   # W tile
                    pl.BlockSpec((1, tn), lambda i, j, k: (0, j)),    # bias
                ],
                out_specs=pl.BlockSpec((tm, tn), lambda i, j, k: (i, j)),
                scratch_shapes=[pltpu.VMEM((tm, tn), jnp.float32)],
            ),
            compiler_params=pltpu.CompilerParams(
                dimension_semantics=("parallel", "parallel", "arbitrary"),
            ),
        )(x_p, w_p, b_p)

    out = out_p if (Mp == M and Np == D_out) else out_p[:M, :D_out]
    return out.reshape(*orig_lead, D_out)


if __name__ == "__main__":
    key = jax.random.PRNGKey(0)
    kx, kw, kb, kx2, kw2, kb2 = jax.random.split(key, 6)

    # --- Small, module-consistent shapes: batch=8, input_dim=32, output_dim=16.
    B, D_in, D_out = 8, 32, 16
    bound = 1.0 / (D_in ** 0.5)
    x = jax.random.normal(kx, (B, D_in), dtype=jnp.float32)
    w = jax.random.uniform(kw, (D_in, D_out), jnp.float32,
                           minval=-bound, maxval=bound)
    b = jax.random.uniform(kb, (D_out,), jnp.float32,
                           minval=-bound, maxval=bound)

    y = mlp_forward(x, w, b)
    jax.block_until_ready(y)
    y_ref = jnp.matmul(x, w, precision=jax.lax.Precision.HIGHEST) + b
    assert y.shape == (B, D_out)
    assert jnp.allclose(y, y_ref, atol=1e-5, rtol=1e-5), "small-shape mismatch"

    # --- Larger shapes exercising the multi-tile (K-reduction) pipelined path.
    B2, D_in2, D_out2 = 256, 512, 384
    bound2 = 1.0 / (D_in2 ** 0.5)
    x2 = jax.random.normal(kx2, (B2, D_in2), dtype=jnp.float32)
    w2 = jax.random.uniform(kw2, (D_in2, D_out2), jnp.float32,
                            minval=-bound2, maxval=bound2)
    b2 = jax.random.uniform(kb2, (D_out2,), jnp.float32,
                            minval=-bound2, maxval=bound2)
    y2 = mlp_forward(x2, w2, b2)
    jax.block_until_ready(y2)
    y2_ref = jnp.matmul(x2, w2, precision=jax.lax.Precision.HIGHEST) + b2
    assert y2.shape == (B2, D_out2)
    assert jnp.allclose(y2, y2_ref, atol=2e-4, rtol=2e-4), "tiled-shape mismatch"

    # --- Shapes needing multiple K steps (forces the accumulator path).
    y3 = mlp_forward(x2, w2, b2, tk=128)
    jax.block_until_ready(y3)
    assert jnp.allclose(y3, y2_ref, atol=2e-4, rtol=2e-4), "multi-K mismatch"

    print("KERNEL_OK")
</pallas_src>

<mosaic_0001>
module attributes {stable_mosaic.version = 11 : i64} {
  func.func @_linear_kernel_single_k(%arg0: i32, %arg1: i32, %arg2: memref<8x128xf32, #tpu.memory_space<vmem>>, %arg3: memref<128x128xf32, #tpu.memory_space<vmem>>, %arg4: memref<1x128xf32, #tpu.memory_space<vmem>>, %arg5: memref<8x128xf32, #tpu.memory_space<vmem>>) attributes {dimension_semantics = [#tpu.dimension_semantics<parallel>, #tpu.dimension_semantics<parallel>], iteration_bounds = array<i64: 1, 1>, scalar_prefetch = 0 : i64, scratch_operands = 0 : i64, tpu.core_type = #tpu.core_type<tc>, window_params = [{transform_indices = @transform_0, window_bounds = array<i64: 8, 128>}, {transform_indices = @transform_1, window_bounds = array<i64: 128, 128>}, {transform_indices = @transform_2, window_bounds = array<i64: 1, 128>}, {transform_indices = @transform_3, window_bounds = array<i64: 8, 128>}]} {
    %c0 = arith.constant 0 : index
    %c0_0 = arith.constant 0 : index
    %0 = vector.load %arg2[%c0, %c0_0] : memref<8x128xf32, #tpu.memory_space<vmem>>, vector<8x128xf32>
    %c0_1 = arith.constant 0 : index
    %c0_2 = arith.constant 0 : index
    %1 = vector.load %arg3[%c0_1, %c0_2] : memref<128x128xf32, #tpu.memory_space<vmem>>, vector<128x128xf32>
    %cst = arith.constant dense<0.000000e+00> : vector<8x128xf32>
    %2 = tpu.matmul %0, %1, %cst {dimension_numbers = #tpu.dot_dimension_numbers<[1], [0], [0], [1], [0, 0, 1, 1], [], []>} : vector<8x128xf32>, vector<128x128xf32>, vector<8x128xf32> -> vector<8x128xf32>
    %c0_3 = arith.constant 0 : index
    %c0_4 = arith.constant 0 : index
    %3 = vector.load %arg4[%c0_3, %c0_4] : memref<1x128xf32, #tpu.memory_space<vmem>>, vector<1x128xf32>
    %4 = vector.broadcast %3 : vector<1x128xf32> to vector<8x128xf32>
    %5 = arith.addf %2, %4 : vector<8x128xf32>
    %c0_5 = arith.constant 0 : index
    %c0_6 = arith.constant 0 : index
    %6 = vector.load %arg5[%c0_5, %c0_6] : memref<8x128xf32, #tpu.memory_space<vmem>>, vector<8x128xf32>
    tpu.vector_store %arg5[%c0_5, %c0_6], %5 {strides = array<i32>} : memref<8x128xf32, #tpu.memory_space<vmem>>, vector<8x128xf32>,
    return
  }
  func.func @transform_0(%arg0: i32, %arg1: i32) -> (i32, i32) {
    %c0_i32 = arith.constant 0 : i32
    %c0_i32_0 = arith.constant 0 : i32
    return %arg0, %c0_i32 : i32, i32
  }
  func.func @transform_1(%arg0: i32, %arg1: i32) -> (i32, i32) {
    %c0_i32 = arith.constant 0 : i32
    %c0_i32_0 = arith.constant 0 : i32
    return %c0_i32, %arg1 : i32, i32
  }
  func.func @transform_2(%arg0: i32, %arg1: i32) -> (i32, i32) {
    %c0_i32 = arith.constant 0 : i32
    %c0_i32_0 = arith.constant 0 : i32
    return %c0_i32, %arg1 : i32, i32
  }
  func.func @transform_3(%arg0: i32, %arg1: i32) -> (i32, i32) {
    %c0_i32 = arith.constant 0 : i32
    return %arg0, %arg1 : i32, i32
  }
}

</mosaic_0001>

<llo_original>
// kernel: mlp_forward.1
$region0: #{mlp_forward.1}
  #allocation0 [shape = 'u32[]', space=smem, size = 0x4, offset = 0x4, fixed_abs, tag = 'smem constant byte address 0x4 - core index']
  #allocation1 [shape = 'u32[72,128]{1,0:T(1,128)}', space=vmem, size = 0x9000, scoped, tag = 'internal scratch']
  %s0 = inlined_call_operand.vmem [shape: f32[8,128], index: 0, kind: input, shape index: {}]
  %s1 = inlined_call_operand.vmem [shape: f32[128,128], index: 1, kind: input, shape index: {}]
  %s2 = inlined_call_operand.vmem [shape: f32[1,128], index: 2, kind: input, shape index: {}]
  %s3 = inlined_call_operand.hbm [shape: f32[8,128], index: 3, kind: output, shape index: {}]
  %s4 = sld [smem:[#allocation0]]
  $region22: #{mlp_forward.1} parent=0
    _
  %s6 = ssub.s32 1, %s4
  %s7 = scalar_select 0, %s6, %s4
  $region1: #{mlp_forward.1} parent=0
    #allocation2 [shape = 'u8[4096]{0}', space=vmem, size = 0x1000, scoped, tag = 'output window, operand 0, single buffered']
    #allocation3 [shape = 's32[1]{0}', space=sflag, size = 0x4, scoped, tag = 'scoped memory for mlp_forward.1']
    %8 = vsyncpa [#allocation3], 0
    // Predicated region
    $region2: #{mlp_forward.1} parent=1 // pred_check
      _
    $region3: #{mlp_forward.1} parent=1 // pred_check_branch
      %10 = sbr.rel (0) target = $region5
    $region4: #{mlp_forward.1} parent=1 // pred_region
      _
    $region5: #{mlp_forward.1} parent=1 // pred_fallthru
      _
    // Predicated region
    $region6: #{mlp_forward.1} parent=1 // pred_check
      _
    $region7: #{mlp_forward.1} parent=1 // pred_check_branch
      %12 = sbr.rel (0) target = $region9
    $region8: #{mlp_forward.1} parent=1 // pred_region
      _
    $region9: #{mlp_forward.1} parent=1 // pred_fallthru
      _
    // Predicated region
    $region10: #{mlp_forward.1} parent=1 // pred_check
      _
    $region11: #{mlp_forward.1} parent=1 // pred_check_branch
      %14 = sbr.rel (0) target = $region13
    $region12: #{mlp_forward.1} parent=1 // pred_region
      _
    $region13: #{mlp_forward.1} parent=1 // pred_fallthru
      _
    %v15 = vld [vmem:[%s0] sm:$0xff]
    %v16 = vld [vmem:[%s1] sm:$0xff]
    %v17 = vld [vmem:[%s1 + $0x8] sm:$0xff]
    %v18 = vld [vmem:[%s1 + $0x10] sm:$0xff]
    %v19 = vld [vmem:[%s1 + $0x18] sm:$0xff]
    %v20 = vld [vmem:[%s1 + $0x20] sm:$0xff]
    %v21 = vld [vmem:[%s1 + $0x28] sm:$0xff]
    %v22 = vld [vmem:[%s1 + $0x30] sm:$0xff]
    %v23 = vld [vmem:[%s1 + $0x38] sm:$0xff]
    %v24 = vld [vmem:[%s1 + $0x40] sm:$0xff]
    %v25 = vld [vmem:[%s1 + $0x48] sm:$0xff]
    %v26 = vld [vmem:[%s1 + $0x50] sm:$0xff]
    %v27 = vld [vmem:[%s1 + $0x58] sm:$0xff]
    %v28 = vld [vmem:[%s1 + $0x60] sm:$0xff]
    %v29 = vld [vmem:[%s1 + $0x68] sm:$0xff]
    %v30 = vld [vmem:[%s1 + $0x70] sm:$0xff]
    %v31 = vld [vmem:[%s1 + $0x78] sm:$0xff]
    %v32 = vld [vmem:[%s2] sm:$0x1]
    %v34 = vperm.slane %v32, 0
    %36 = vmatpush.msra.mxu0 %v31
    %37 = vmatpush.msra.mxu0 %v30
    %38 = vmatpush.msra.mxu0 %v29
    %39 = vmatpush.msra.mxu0 %v28
    %40 = vmatpush.msra.mxu0 %v27
    %41 = vmatpush.msra.mxu0 %v26
    %42 = vmatpush.msra.mxu0 %v25
    %43 = vmatpush.msra.mxu0 %v24
    %44 = vmatpush.msra.mxu0 %v23
    %45 = vmatpush.msra.mxu0 %v22
    %46 = vmatpush.msra.mxu0 %v21
    %47 = vmatpush.msra.mxu0 %v20
    %48 = vmatpush.msra.mxu0 %v19
    %49 = vmatpush.msra.mxu0 %v18
    %50 = vmatpush.msra.mxu0 %v17
    %51 = vmatpush.msra.mxu0 %v16
    %52 = vmatmul.f32.gmra.mxu0 %v15
    %v53 = vpop.f32.mrf.mxu0
    %v54 = vadd.f32 %v34, %v53
    %55 = vdwg.mxu0
    %56 = vst [vmem:[#allocation2] sm:$0xff] %v54
    // Predicated region
    $region14: #{mlp_forward.1} parent=1 // pred_check
      _
    $region15: #{mlp_forward.1} parent=1 // pred_check_branch
      %58 = sbr.rel (0) target = $region17
    $region16: #{mlp_forward.1} parent=1 // pred_region
      %60 = vsyncadd [#allocation3], 0
      %s62 = sshll.u32 [#allocation2], 4
      %s63 = int_to_ptr.vmem [resolvable:$true] %s62
      %s64 = sshll.u32 %s3, 4
      %s65 = int_to_ptr.hbm [resolvable:$true] %s64
      %67 = dma.vmem_to_hbm [thread:$0]  %s63, 128, %s65, [#allocation3]
    $region17: #{mlp_forward.1} parent=1 // pred_fallthru
      _
    // Predicated region
    $region18: #{mlp_forward.1} parent=1 // pred_check
      _
    $region19: #{mlp_forward.1} parent=1 // pred_check_branch
      %69 = sbr.rel (0) target = $region21
    $region20: #{mlp_forward.1} parent=1 // pred_region
      %71 = dma.done [#allocation3], 128
    $region21: #{mlp_forward.1} parent=1 // pred_fallthru
      _
    %72 = vsyncpa [#allocation3], 1

</llo_original>
